<compile_context>
chip_gen: v6e
topology: v6e:2x2x1
jax: 0.10.0
libtpu: 0.0.40
codegen_flags: <defaults>
</compile_context>

<pallas_src>
import functools
import math

import jax
import jax.numpy as jnp
from jax.experimental import pallas as pl
from jax.experimental.pallas import tpu as pltpu


def _round_up(x, m):
    return -(-x // m) * m


def _copo_kernel(action_dim, act_rows, obs_ref, w1_ref, b1_ref, w2_ref, b2_ref,
                 wh_ref, bh_ref, out_ref):
    mm_dt = w1_ref.dtype
    obs = obs_ref[...].astype(mm_dt)                       # (tb, obs_dim), batch-major tile

    # Layer 1, feature-major: z1 = W1 @ obs^T -> (net_width, tb).
    # NT contraction (both last dims) == the flash-attention q @ k^T pattern.
    z1 = jax.lax.dot_general(
        w1_ref[...], obs,
        dimension_numbers=(((1,), (1,)), ((), ())),
        preferred_element_type=jnp.float32)
    x1 = jnp.tanh(z1 + b1_ref[...])                        # (net_width, tb), f32

    # Layer 2: (net_width, tb)
    x2 = jnp.tanh(
        jnp.dot(w2_ref[...], x1.astype(mm_dt),
                preferred_element_type=jnp.float32) + b2_ref[...])

    # Fused head: rows = [mu | sigma | scalar heads | zero pad] -> (head_rows, tb)
    h = jnp.dot(wh_ref[...], x2.astype(mm_dt),
                preferred_element_type=jnp.float32) + bh_ref[...]

    # Activations only on the first `act_rows` sublanes (mu rows, then sigma
    # rows); one shared exp serves both sigmoid and softplus.
    h_top = h[0:act_rows, :]
    row = jax.lax.broadcasted_iota(jnp.int32, h_top.shape, 0)
    e = jnp.exp(-jnp.abs(h_top))
    r = pl.reciprocal(1.0 + e, approx=True)
    sig = jnp.where(h_top >= 0.0, r, e * r)                # sigmoid(h_top)
    sp = jnp.maximum(jnp.maximum(h_top, 0.0) + jnp.log1p(e), 0.001)  # softplus, clamped
    out_ref[0:act_rows, :] = jnp.where(
        row < action_dim, sig, jnp.where(row < 2 * action_dim, sp, h_top))
    # Scalar heads (and zero-pad rows) pass through unchanged.
    if act_rows < out_ref.shape[0]:
        out_ref[act_rows:, :] = h[act_rows:, :]


def _linear_init(key, fan_in, fan_out):
    """nn.Linear default init, weight stored (out_features, in_features)."""
    kw, kb = jax.random.split(key)
    bound = 1.0 / math.sqrt(fan_in)
    w = jax.random.uniform(kw, (fan_out, fan_in), jnp.float32, -bound, bound)
    b = jax.random.uniform(kb, (fan_out, 1), jnp.float32, -bound, bound)
    return w, b


def init_share_layer_copo_params(key, obs_dim, action_dim, net_width, copo_kind,
                                 use_bf16_matmul=False):
    assert copo_kind in (1, 2)
    keys = jax.random.split(key, 8)
    w1, b1 = _linear_init(keys[0], obs_dim, net_width)
    w2, b2 = _linear_init(keys[1], net_width, net_width)
    wmu, bmu = _linear_init(keys[2], net_width, action_dim)
    wsg, bsg = _linear_init(keys[3], net_width, action_dim)
    wv, bv = _linear_init(keys[4], net_width, 1)
    wg, bg = _linear_init(keys[5], net_width, 1)
    if copo_kind == 1:
        wn, bn = _linear_init(keys[6], net_width, 1)
        wsc = jnp.concatenate([wv, wn, wg], axis=0)        # value, nei, global
        bsc = jnp.concatenate([bv, bn, bg], axis=0)
    else:
        wu, bu = _linear_init(keys[6], net_width, 1)
        wc, bc = _linear_init(keys[7], net_width, 1)
        wsc = jnp.concatenate([wv, wu, wc, wg], axis=0)    # value, uav, car, global
        bsc = jnp.concatenate([bv, bu, bc, bg], axis=0)

    n_scalar = wsc.shape[0]
    total = 2 * action_dim + n_scalar
    head_rows = _round_up(total, 8)                        # sublane-padded head height

    # Fused head (done ONCE here): rows = [mu | sigma | scalar heads | zero pad].
    wh = jnp.concatenate([wmu, wsg, wsc], axis=0)
    bh = jnp.concatenate([bmu, bsg, bsc], axis=0)
    wh = jnp.pad(wh, ((0, head_rows - total), (0, 0)))
    bh = jnp.pad(bh, ((0, head_rows - total), (0, 0)))

    mm_dtype = jnp.bfloat16 if use_bf16_matmul else jnp.float32
    return dict(
        # kernel params (weights possibly bf16; biases stay f32)
        w1=w1.astype(mm_dtype), b1=b1,
        w2=w2.astype(mm_dtype), b2=b2,
        wh=wh.astype(mm_dtype), bh=bh,
        # raw f32 params kept for the pure-JAX reference check
        rw1=w1, rb1=b1, rw2=w2, rb2=b2,
        rwmu=wmu, rbmu=bmu, rwsg=wsg, rbsg=bsg, rwsc=wsc, rbsc=bsc,
        copo_kind=copo_kind, action_dim=action_dim, n_scalar=n_scalar)


@functools.partial(jax.jit, static_argnames=("tile_b", "action_dim", "n_scalar"))
def _forward_impl(obs, w1, b1, w2, b2, wh, bh, *, tile_b, action_dim, n_scalar):
    B, obs_dim = obs.shape
    head_rows = wh.shape[0]
    act_rows = min(_round_up(2 * action_dim, 8), head_rows)

    # Batch sits on the LANE axis, so tiles are multiples of 128.  Balance
    # ragged batches across blocks and keep >= 2 blocks whenever B > 128 so
    # both v7x TensorCores get work (no effect on 1-TC v5e/v6e beyond one
    # extra ~0.35us grid step).
    n_blocks = max(2, pl.cdiv(B, tile_b))
    tb = _round_up(pl.cdiv(B, n_blocks), 128)
    tb = min(tb, _round_up(B, 128))
    grid_b = pl.cdiv(B, tb)
    b_pad = grid_b * tb
    if b_pad != B:
        obs = jnp.pad(obs, ((0, b_pad - B), (0, 0)))

    def resident(shape):
        return pl.BlockSpec(shape, lambda i: (0, 0))

    out = pl.pallas_call(
        functools.partial(_copo_kernel, action_dim, act_rows),
        out_shape=jax.ShapeDtypeStruct((head_rows, b_pad), jnp.float32),
        grid_spec=pltpu.PrefetchScalarGridSpec(
            num_scalar_prefetch=0,
            grid=(grid_b,),
            in_specs=[
                pl.BlockSpec((tb, obs_dim), lambda i: (i, 0)),   # obs tile (batch-major)
                resident(w1.shape), resident(b1.shape),
                resident(w2.shape), resident(b2.shape),
                resident(wh.shape), resident(bh.shape),
            ],
            out_specs=pl.BlockSpec((head_rows, tb), lambda i: (0, i)),
        ),
        compiler_params=pltpu.CompilerParams(
            dimension_semantics=("parallel",)),
    )(obs, w1, b1, w2, b2, wh, bh)

    out = out[:, :B]                                   # (head_rows, B) feature-major
    mu = out[0:action_dim, :].T
    sigma = out[action_dim:2 * action_dim, :].T
    base = 2 * action_dim
    slab = out[base:base + n_scalar, :].T              # scalar heads sliced once
    scalars = tuple(slab[:, i:i + 1] for i in range(n_scalar))
    return (mu, sigma) + scalars


def share_layer_copo_forward(obs, params, *, tile_b=2048):
    """Equivalent of ShareLayerCopoModel.forward(obs).

    copo_kind == 1 -> (mu, sigma, value, nei, global)
    copo_kind == 2 -> (mu, sigma, value, uav, car, global)
    """
    return _forward_impl(
        obs,
        params["w1"], params["b1"], params["w2"], params["b2"],
        params["wh"], params["bh"],
        tile_b=tile_b,
        action_dim=params["action_dim"],
        n_scalar=params["n_scalar"])


def _reference_forward(obs, params):
    """Pure-JAX f32 reference of the PyTorch forward (uses UNfused weights)."""
    x = jnp.tanh(obs @ params["rw1"].T + params["rb1"][:, 0])
    x = jnp.tanh(x @ params["rw2"].T + params["rb2"][:, 0])
    mu = jax.nn.sigmoid(x @ params["rwmu"].T + params["rbmu"][:, 0])
    sigma = jnp.maximum(
        jax.nn.softplus(x @ params["rwsg"].T + params["rbsg"][:, 0]), 0.001)
    heads = x @ params["rwsc"].T + params["rbsc"][:, 0]
    scalars = tuple(heads[:, i:i + 1] for i in range(heads.shape[1]))
    return (mu, sigma) + scalars


if __name__ == "__main__":
    key = jax.random.PRNGKey(0)
    obs_dim, action_dim, net_width = 16, 4, 32

    k_obs1, k_obs2, k_obs3, k_p1, k_p2, k_p3 = jax.random.split(key, 6)
    # (obs, copo_kind, param_key, use_bf16_matmul, tolerance)
    #  - batch=16  : aligned, copo_kind=1, f32 matmuls
    #  - batch=13  : ragged (padding path), copo_kind=2, f32 matmuls
    #  - batch=200 : two grid blocks, copo_kind=1, bf16 matmul inputs
    test_cases = (
        (jax.random.normal(k_obs1, (16, obs_dim), jnp.float32), 1, k_p1, False, 5e-3),
        (jax.random.normal(k_obs2, (13, obs_dim), jnp.float32), 2, k_p2, False, 5e-3),
        (jax.random.normal(k_obs3, (200, obs_dim), jnp.float32), 1, k_p3, True, 5e-2),
    )

    ok = True
    for obs, copo_kind, k_params, use_bf16, tol in test_cases:
        params = init_share_layer_copo_params(
            k_params, obs_dim, action_dim, net_width, copo_kind,
            use_bf16_matmul=use_bf16)
        outs = share_layer_copo_forward(obs, params)
        outs = jax.block_until_ready(outs)
        refs = _reference_forward(obs, params)
        expected_n = 5 if copo_kind == 1 else 6
        if len(outs) != expected_n:
            ok = False
        for o, r in zip(outs, refs):
            if o.shape != r.shape or not jnp.allclose(o, r, atol=tol, rtol=tol):
                ok = False

    if ok:
        print("KERNEL_OK")
</pallas_src>

<mosaic_0001>
module attributes {stable_mosaic.version = 11 : i64} {
  func.func @_copo_kernel(%arg0: i32, %arg1: memref<128x16xf32, #tpu.memory_space<vmem>>, %arg2: memref<32x16xf32, #tpu.memory_space<vmem>>, %arg3: memref<32x1xf32, #tpu.memory_space<vmem>>, %arg4: memref<32x32xf32, #tpu.memory_space<vmem>>, %arg5: memref<32x1xf32, #tpu.memory_space<vmem>>, %arg6: memref<16x32xf32, #tpu.memory_space<vmem>>, %arg7: memref<16x1xf32, #tpu.memory_space<vmem>>, %arg8: memref<16x128xf32, #tpu.memory_space<vmem>>) attributes {dimension_semantics = [#tpu.dimension_semantics<parallel>], iteration_bounds = array<i64: 1>, scalar_prefetch = 0 : i64, scratch_operands = 0 : i64, tpu.core_type = #tpu.core_type<tc>, window_params = [{transform_indices = @transform_0, window_bounds = array<i64: 128, 16>}, {pipeline_mode = #tpu.pipeline_mode<synchronous>, transform_indices = @transform_1, window_bounds = array<i64: 32, 16>}, {pipeline_mode = #tpu.pipeline_mode<synchronous>, transform_indices = @transform_2, window_bounds = array<i64: 32, 1>}, {pipeline_mode = #tpu.pipeline_mode<synchronous>, transform_indices = @transform_3, window_bounds = array<i64: 32, 32>}, {pipeline_mode = #tpu.pipeline_mode<synchronous>, transform_indices = @transform_4, window_bounds = array<i64: 32, 1>}, {pipeline_mode = #tpu.pipeline_mode<synchronous>, transform_indices = @transform_5, window_bounds = array<i64: 16, 32>}, {pipeline_mode = #tpu.pipeline_mode<synchronous>, transform_indices = @transform_6, window_bounds = array<i64: 16, 1>}, {transform_indices = @transform_7, window_bounds = array<i64: 16, 128>}]} {
    %c0 = arith.constant 0 : index
    %c0_0 = arith.constant 0 : index
    %0 = vector.load %arg1[%c0, %c0_0] : memref<128x16xf32, #tpu.memory_space<vmem>>, vector<128x16xf32>
    %c0_1 = arith.constant 0 : index
    %c0_2 = arith.constant 0 : index
    %1 = vector.load %arg2[%c0_1, %c0_2] : memref<32x16xf32, #tpu.memory_space<vmem>>, vector<32x16xf32>
    %cst = arith.constant dense<0.000000e+00> : vector<32x128xf32>
    %2 = tpu.matmul %1, %0, %cst {dimension_numbers = #tpu.dot_dimension_numbers<[1], [1], [0], [0], [0, 0, 1, 0], [], []>} : vector<32x16xf32>, vector<128x16xf32>, vector<32x128xf32> -> vector<32x128xf32>
    %c0_3 = arith.constant 0 : index
    %c0_4 = arith.constant 0 : index
    %3 = vector.load %arg3[%c0_3, %c0_4] : memref<32x1xf32, #tpu.memory_space<vmem>>, vector<32x1xf32>
    %4 = vector.broadcast %3 : vector<32x1xf32> to vector<32x128xf32>
    %5 = arith.addf %2, %4 : vector<32x128xf32>
    %6 = math.tanh %5 : vector<32x128xf32>
    %c0_5 = arith.constant 0 : index
    %c0_6 = arith.constant 0 : index
    %7 = vector.load %arg4[%c0_5, %c0_6] : memref<32x32xf32, #tpu.memory_space<vmem>>, vector<32x32xf32>
    %cst_7 = arith.constant dense<0.000000e+00> : vector<32x128xf32>
    %8 = tpu.matmul %7, %6, %cst_7 {dimension_numbers = #tpu.dot_dimension_numbers<[1], [0], [0], [1], [0, 0, 1, 1], [], []>} : vector<32x32xf32>, vector<32x128xf32>, vector<32x128xf32> -> vector<32x128xf32>
    %c0_8 = arith.constant 0 : index
    %c0_9 = arith.constant 0 : index
    %9 = vector.load %arg5[%c0_8, %c0_9] : memref<32x1xf32, #tpu.memory_space<vmem>>, vector<32x1xf32>
    %10 = vector.broadcast %9 : vector<32x1xf32> to vector<32x128xf32>
    %11 = arith.addf %8, %10 : vector<32x128xf32>
    %12 = math.tanh %11 : vector<32x128xf32>
    %c0_10 = arith.constant 0 : index
    %c0_11 = arith.constant 0 : index
    %13 = vector.load %arg6[%c0_10, %c0_11] : memref<16x32xf32, #tpu.memory_space<vmem>>, vector<16x32xf32>
    %cst_12 = arith.constant dense<0.000000e+00> : vector<16x128xf32>
    %14 = tpu.matmul %13, %12, %cst_12 {dimension_numbers = #tpu.dot_dimension_numbers<[1], [0], [0], [1], [0, 0, 1, 1], [], []>} : vector<16x32xf32>, vector<32x128xf32>, vector<16x128xf32> -> vector<16x128xf32>
    %c0_13 = arith.constant 0 : index
    %c0_14 = arith.constant 0 : index
    %15 = vector.load %arg7[%c0_13, %c0_14] : memref<16x1xf32, #tpu.memory_space<vmem>>, vector<16x1xf32>
    %16 = vector.broadcast %15 : vector<16x1xf32> to vector<16x128xf32>
    %17 = arith.addf %14, %16 : vector<16x128xf32>
    %18 = vector.extract_strided_slice %17 {offsets = [0, 0], sizes = [8, 128], strides = [1, 1]} : vector<16x128xf32> to vector<8x128xf32>
    %19 = tpu.iota {dimensions = array<i32: 0>} : vector<8x128xi32>
    %20 = math.absf %18 : vector<8x128xf32>
    %cst_15 = arith.constant 0.000000e+00 : f32
    %21 = vector.broadcast %cst_15 : f32 to vector<8x128xf32>
    %22 = arith.subf %21, %20 : vector<8x128xf32>
    %23 = math.exp %22 : vector<8x128xf32>
    %cst_16 = arith.constant 1.000000e+00 : f32
    %24 = vector.broadcast %cst_16 : f32 to vector<8x128xf32>
    %25 = arith.addf %24, %23 : vector<8x128xf32>
    %26 = tpu.reciprocal %25 {approx = true} : vector<8x128xf32> -> vector<8x128xf32>
    %cst_17 = arith.constant 0.000000e+00 : f32
    %27 = vector.broadcast %cst_17 : f32 to vector<8x128xf32>
    %28 = arith.cmpf oge, %18, %27 : vector<8x128xf32>
    %29 = arith.mulf %23, %26 : vector<8x128xf32>
    %30 = arith.select %28, %26, %29 : vector<8x128xi1>, vector<8x128xf32>
    %cst_18 = arith.constant 0.000000e+00 : f32
    %31 = vector.broadcast %cst_18 : f32 to vector<8x128xf32>
    %32 = arith.maximumf %18, %31 : vector<8x128xf32>
    %33 = math.log1p %23 : vector<8x128xf32>
    %34 = arith.addf %32, %33 : vector<8x128xf32>
    %cst_19 = arith.constant 1.000000e-03 : f32
    %35 = vector.broadcast %cst_19 : f32 to vector<8x128xf32>
    %36 = arith.maximumf %34, %35 : vector<8x128xf32>
    %c4_i32 = arith.constant 4 : i32
    %37 = vector.broadcast %c4_i32 : i32 to vector<8x128xi32>
    %38 = arith.cmpi slt, %19, %37 : vector<8x128xi32>
    %c8_i32 = arith.constant 8 : i32
    %39 = vector.broadcast %c8_i32 : i32 to vector<8x128xi32>
    %40 = arith.cmpi slt, %19, %39 : vector<8x128xi32>
    %41 = arith.select %40, %36, %18 : vector<8x128xi1>, vector<8x128xf32>
    %42 = arith.select %38, %30, %41 : vector<8x128xi1>, vector<8x128xf32>
    %c0_20 = arith.constant 0 : index
    %c0_21 = arith.constant 0 : index
    %43 = vector.load %arg8[%c0_20, %c0_21] : memref<16x128xf32, #tpu.memory_space<vmem>>, vector<8x128xf32>
    tpu.vector_store %arg8[%c0_20, %c0_21], %42 {strides = array<i32>} : memref<16x128xf32, #tpu.memory_space<vmem>>, vector<8x128xf32>,
    %44 = vector.extract_strided_slice %17 {offsets = [8, 0], sizes = [8, 128], strides = [1, 1]} : vector<16x128xf32> to vector<8x128xf32>
    %c8 = arith.constant 8 : index
    %c0_22 = arith.constant 0 : index
    %45 = vector.load %arg8[%c8, %c0_22] : memref<16x128xf32, #tpu.memory_space<vmem>>, vector<8x128xf32>
    tpu.vector_store %arg8[%c8, %c0_22], %44 {strides = array<i32>} : memref<16x128xf32, #tpu.memory_space<vmem>>, vector<8x128xf32>,
    return
  }
  func.func @transform_0(%arg0: i32) -> (i32, i32) {
    %c0_i32 = arith.constant 0 : i32
    %c0_i32_0 = arith.constant 0 : i32
    return %arg0, %c0_i32 : i32, i32
  }
  func.func @transform_1(%arg0: i32) -> (i32, i32) {
    %c0_i32 = arith.constant 0 : i32
    %c0_i32_0 = arith.constant 0 : i32
    %c0_i32_1 = arith.constant 0 : i32
    return %c0_i32, %c0_i32_0 : i32, i32
  }
  func.func @transform_2(%arg0: i32) -> (i32, i32) {
    %c0_i32 = arith.constant 0 : i32
    %c0_i32_0 = arith.constant 0 : i32
    %c0_i32_1 = arith.constant 0 : i32
    return %c0_i32, %c0_i32_0 : i32, i32
  }
  func.func @transform_3(%arg0: i32) -> (i32, i32) {
    %c0_i32 = arith.constant 0 : i32
    %c0_i32_0 = arith.constant 0 : i32
    %c0_i32_1 = arith.constant 0 : i32
    return %c0_i32, %c0_i32_0 : i32, i32
  }
  func.func @transform_4(%arg0: i32) -> (i32, i32) {
    %c0_i32 = arith.constant 0 : i32
    %c0_i32_0 = arith.constant 0 : i32
    %c0_i32_1 = arith.constant 0 : i32
    return %c0_i32, %c0_i32_0 : i32, i32
  }
  func.func @transform_5(%arg0: i32) -> (i32, i32) {
    %c0_i32 = arith.constant 0 : i32
    %c0_i32_0 = arith.constant 0 : i32
    %c0_i32_1 = arith.constant 0 : i32
    return %c0_i32, %c0_i32_0 : i32, i32
  }
  func.func @transform_6(%arg0: i32) -> (i32, i32) {
    %c0_i32 = arith.constant 0 : i32
    %c0_i32_0 = arith.constant 0 : i32
    %c0_i32_1 = arith.constant 0 : i32
    return %c0_i32, %c0_i32_0 : i32, i32
  }
  func.func @transform_7(%arg0: i32) -> (i32, i32) {
    %c0_i32 = arith.constant 0 : i32
    %c0_i32_0 = arith.constant 0 : i32
    return %c0_i32, %arg0 : i32, i32
  }
}

</mosaic_0001>

<llo_original>
// kernel: _forward_impl.1
$region0: #{_forward_impl.1}
  #allocation0 [shape = 'u32[]', space=smem, size = 0x4, offset = 0x4, fixed_abs, tag = 'smem constant byte address 0x4 - core index']
  #allocation1 [shape = 'u32[144,128]{1,0:T(1,128)}', space=vmem, size = 0x12000, scoped, tag = 'internal scratch']
  %s0 = inlined_call_operand.vmem [shape: f32[128,16], index: 0, kind: input, shape index: {}]
  %s1 = inlined_call_operand.vmem [shape: f32[32,16], index: 1, kind: input, shape index: {}]
  %s2 = inlined_call_operand.vmem [shape: f32[32,1], index: 2, kind: input, shape index: {}]
  %s3 = inlined_call_operand.vmem [shape: f32[32,32], index: 3, kind: input, shape index: {}]
  %s4 = inlined_call_operand.vmem [shape: f32[32,1], index: 4, kind: input, shape index: {}]
  %s5 = inlined_call_operand.vmem [shape: f32[16,32], index: 5, kind: input, shape index: {}]
  %s6 = inlined_call_operand.vmem [shape: f32[16,1], index: 6, kind: input, shape index: {}]
  %s7 = inlined_call_operand.vmem [shape: f32[16,128], index: 7, kind: output, shape index: {}]
  %s8 = sld [smem:[#allocation0]]
  $region38: #{_forward_impl.1} parent=0
    _
  %s10 = ssub.s32 1, %s8
  %s11 = scalar_select 0, %s10, %s8
  // Predicated region
  $region2: #{_forward_impl.1} parent=0 // pred_check
    _
  $region3: #{_forward_impl.1} parent=0 // pred_check_branch
    %13 = sbr.rel (0) target = $region5
  $region4: #{_forward_impl.1} parent=0 // pred_region
    _
  $region5: #{_forward_impl.1} parent=0 // pred_fallthru
    _
  // Predicated region
  $region6: #{_forward_impl.1} parent=0 // pred_check
    _
  $region7: #{_forward_impl.1} parent=0 // pred_check_branch
    %15 = sbr.rel (0) target = $region9
  $region8: #{_forward_impl.1} parent=0 // pred_region
    _
  $region9: #{_forward_impl.1} parent=0 // pred_fallthru
    _
  // Predicated region
  $region10: #{_forward_impl.1} parent=0 // pred_check
    _
  $region11: #{_forward_impl.1} parent=0 // pred_check_branch
    %17 = sbr.rel (0) target = $region13
  $region12: #{_forward_impl.1} parent=0 // pred_region
    _
  $region13: #{_forward_impl.1} parent=0 // pred_fallthru
    _
  // Predicated region
  $region14: #{_forward_impl.1} parent=0 // pred_check
    _
  $region15: #{_forward_impl.1} parent=0 // pred_check_branch
    %19 = sbr.rel (0) target = $region17
  $region16: #{_forward_impl.1} parent=0 // pred_region
    _
  $region17: #{_forward_impl.1} parent=0 // pred_fallthru
    _
  // Predicated region
  $region18: #{_forward_impl.1} parent=0 // pred_check
    _
  $region19: #{_forward_impl.1} parent=0 // pred_check_branch
    %21 = sbr.rel (0) target = $region21
  $region20: #{_forward_impl.1} parent=0 // pred_region
    _
  $region21: #{_forward_impl.1} parent=0 // pred_fallthru
    _
  // Predicated region
  $region22: #{_forward_impl.1} parent=0 // pred_check
    _
  $region23: #{_forward_impl.1} parent=0 // pred_check_branch
    %23 = sbr.rel (0) target = $region25
  $region24: #{_forward_impl.1} parent=0 // pred_region
    _
  $region25: #{_forward_impl.1} parent=0 // pred_fallthru
    _
  // Predicated region
  $region26: #{_forward_impl.1} parent=0 // pred_check
    _
  $region27: #{_forward_impl.1} parent=0 // pred_check_branch
    %25 = sbr.rel (0) target = $region29
  $region28: #{_forward_impl.1} parent=0 // pred_region
    _
  $region29: #{_forward_impl.1} parent=0 // pred_fallthru
    _
  %v26 = vld [vmem:[%s0] sm:$0xff]
  %v27 = vld [vmem:[%s0 + $0x8] sm:$0xff]
  %v28 = vld [vmem:[%s0 + $0x10] sm:$0xff]
  %v29 = vld [vmem:[%s0 + $0x18] sm:$0xff]
  %v30 = vld [vmem:[%s0 + $0x20] sm:$0xff]
  %v31 = vld [vmem:[%s0 + $0x28] sm:$0xff]
  %v32 = vld [vmem:[%s0 + $0x30] sm:$0xff]
  %v33 = vld [vmem:[%s0 + $0x38] sm:$0xff]
  %v34 = vld [vmem:[%s0 + $0x40] sm:$0xff]
  %v35 = vld [vmem:[%s0 + $0x48] sm:$0xff]
  %v36 = vld [vmem:[%s0 + $0x50] sm:$0xff]
  %v37 = vld [vmem:[%s0 + $0x58] sm:$0xff]
  %v38 = vld [vmem:[%s0 + $0x60] sm:$0xff]
  %v39 = vld [vmem:[%s0 + $0x68] sm:$0xff]
  %v40 = vld [vmem:[%s0 + $0x70] sm:$0xff]
  %v41 = vld [vmem:[%s0 + $0x78] sm:$0xff]
  %v42 = vld [vmem:[%s1] sm:$0xff]
  %v43 = vld [vmem:[%s1 + $0x8] sm:$0xff]
  %v44 = vld [vmem:[%s1 + $0x10] sm:$0xff]
  %v45 = vld [vmem:[%s1 + $0x18] sm:$0xff]
  %v46 = vld [vmem:[%s2] sm:$0xff]
  %v47 = vld [vmem:[%s2 + $0x8] sm:$0xff]
  %v48 = vld [vmem:[%s2 + $0x10] sm:$0xff]
  %v49 = vld [vmem:[%s2 + $0x18] sm:$0xff]
  %51 = vset.pattern.permute.xlu0 0
  %52 = vperm.xlu0 %51, %v46
  %v53 = vpop.permute.xlu0 %52
  %56 = vset.pattern.permute.xlu0 0
  %57 = vperm.xlu0 %56, %v47
  %v58 = vpop.permute.xlu0 %57
  %61 = vset.pattern.permute.xlu0 0
  %62 = vperm.xlu0 %61, %v48
  %v63 = vpop.permute.xlu0 %62
  %66 = vset.pattern.permute.xlu0 0
  %67 = vperm.xlu0 %66, %v49
  %v68 = vpop.permute.xlu0 %67
  %vm70 = vcmask 130048
  %v72 = vsel %vm70, %v42, 0
  %v75 = vsel %vm70, %v43, 0
  %v78 = vsel %vm70, %v44, 0
  %v81 = vsel %vm70, %v45, 0
  %v84 = vsel %vm70, %v26, 0
  %v87 = vsel %vm70, %v27, 0
  %v90 = vsel %vm70, %v28, 0
  %v93 = vsel %vm70, %v29, 0
  %v96 = vsel %vm70, %v30, 0
  %v99 = vsel %vm70, %v31, 0
  %v102 = vsel %vm70, %v32, 0
  %v105 = vsel %vm70, %v33, 0
  %v108 = vsel %vm70, %v34, 0
  %v111 = vsel %vm70, %v35, 0
  %v114 = vsel %vm70, %v36, 0
  %v117 = vsel %vm70, %v37, 0
  %v120 = vsel %vm70, %v38, 0
  %v123 = vsel %vm70, %v39, 0
  %v126 = vsel %vm70, %v40, 0
  %v129 = vsel %vm70, %v41, 0
  %131 = vmatprep.subr.mxu0 0.0
  %132 = vmatpush1.xpose.msra.mxu0 %v129
  %133 = vmatprep.subr.mxu0 0.0
  %134 = vmatpush1.xpose.msra.mxu0 %v126
  %135 = vmatprep.subr.mxu0 0.0
  %136 = vmatpush1.xpose.msra.mxu0 %v123
  %137 = vmatprep.subr.mxu0 0.0
  %138 = vmatpush1.xpose.msra.mxu0 %v120
  %139 = vmatprep.subr.mxu0 0.0
  %140 = vmatpush1.xpose.msra.mxu0 %v117
  %141 = vmatprep.subr.mxu0 0.0
  %142 = vmatpush1.xpose.msra.mxu0 %v114
  %143 = vmatprep.subr.mxu0 0.0
  %144 = vmatpush1.xpose.msra.mxu0 %v111
  %145 = vmatprep.subr.mxu0 0.0
  %146 = vmatpush1.xpose.msra.mxu0 %v108
  %147 = vmatprep.subr.mxu0 0.0
  %148 = vmatpush1.xpose.msra.mxu0 %v105
  %149 = vmatprep.subr.mxu0 0.0
  %150 = vmatpush1.xpose.msra.mxu0 %v102
  %151 = vmatprep.subr.mxu0 0.0
  %152 = vmatpush1.xpose.msra.mxu0 %v99
  %153 = vmatprep.subr.mxu0 0.0
  %154 = vmatpush1.xpose.msra.mxu0 %v96
  %155 = vmatprep.subr.mxu0 0.0
  %156 = vmatpush1.xpose.msra.mxu0 %v93
  %157 = vmatprep.subr.mxu0 0.0
  %158 = vmatpush1.xpose.msra.mxu0 %v90
  %159 = vmatprep.subr.mxu0 0.0
  %160 = vmatpush1.xpose.msra.mxu0 %v87
  %161 = vmatprep.subr.mxu0 0.0
  %162 = vmatpush1.xpose.msra.mxu0 %v84
  %163 = vmatprep.subr.mxu0 0.0
  %164 = vmatpush2.xpose.msra.mxu0 0.0
  %165 = vmatprep.subr.mxu0 0.0
  %166 = vmatpush2.xpose.msra.mxu0 0.0
  %167 = vmatprep.subr.mxu0 0.0
  %168 = vmatpush2.xpose.msra.mxu0 0.0
  %169 = vmatprep.subr.mxu0 0.0
  %170 = vmatpush2.xpose.msra.mxu0 0.0
  %171 = vmatprep.subr.mxu0 0.0
  %172 = vmatpush2.xpose.msra.mxu0 0.0
  %173 = vmatprep.subr.mxu0 0.0
  %174 = vmatpush2.xpose.msra.mxu0 0.0
  %175 = vmatprep.subr.mxu0 0.0
  %176 = vmatpush2.xpose.msra.mxu0 0.0
  %177 = vmatprep.subr.mxu0 0.0
  %178 = vmatpush2.xpose.msra.mxu0 0.0
  %179 = vmatprep.subr.mxu0 0.0
  %180 = vmatpush2.xpose.msra.mxu0 0.0
  %181 = vmatprep.subr.mxu0 0.0
  %182 = vmatpush2.xpose.msra.mxu0 0.0
  %183 = vmatprep.subr.mxu0 0.0
  %184 = vmatpush2.xpose.msra.mxu0 0.0
  %185 = vmatprep.subr.mxu0 0.0
  %186 = vmatpush2.xpose.msra.mxu0 0.0
  %187 = vmatprep.subr.mxu0 0.0
  %188 = vmatpush2.xpose.msra.mxu0 0.0
  %189 = vmatprep.subr.mxu0 0.0
  %190 = vmatpush2.xpose.msra.mxu0 0.0
  %191 = vmatprep.subr.mxu0 0.0
  %192 = vmatpush2.xpose.msra.mxu0 0.0
  %193 = vmatprep.subr.mxu0 0.0
  %194 = vmatpush2.xpose.msra.mxu0 0.0
  %195 = vmatprep.mubr.f32.mxu0 0.0
  %196 = vmatmul.mubr.f32.gmra.mxu0 %v72
  %v197 = vpop.f32.mrf.mxu0
  %v198 = vadd.f32 %v53, %v197
  %v199 = vpop.f32.mrf.mxu0
  %200 = vmatprep.mubr.f32.mxu0 0.0
  %201 = vmatmul.mubr.f32.gmra.mxu0 %v75
  %v202 = vpop.f32.mrf.mxu0
  %v203 = vadd.f32 %v58, %v202
  %v204 = vpop.f32.mrf.mxu0
  %205 = vmatprep.mubr.f32.mxu0 0.0
  %206 = vmatmul.mubr.f32.gmra.mxu0 %v78
  %v207 = vpop.f32.mrf.mxu0
  %v208 = vadd.f32 %v63, %v207
  %v209 = vpop.f32.mrf.mxu0
  %210 = vmatprep.mubr.f32.mxu0 0.0
  %211 = vmatmul.mubr.f32.gmra.mxu0 %v81
  %v212 = vpop.f32.mrf.mxu0
  %v213 = vadd.f32 %v68, %v212
  %v214 = vpop.f32.mrf.mxu0
  %215 = vdwg.mxu0
  %v216 = vtanh.pop %v198
  %v217 = vtanh.pop %v203
  %v218 = vtanh.pop %v208
  %v219 = vtanh.pop %v213
  %v220 = vld [vmem:[%s3] sm:$0xff]
  %v221 = vld [vmem:[%s3 + $0x8] sm:$0xff]
  %v222 = vld [vmem:[%s3 + $0x10] sm:$0xff]
  %v223 = vld [vmem:[%s3 + $0x18] sm:$0xff]
  %v224 = vld [vmem:[%s4] sm:$0xff]
  %v225 = vld [vmem:[%s4 + $0x8] sm:$0xff]
  %v226 = vld [vmem:[%s4 + $0x10] sm:$0xff]
  %v227 = vld [vmem:[%s4 + $0x18] sm:$0xff]
  %229 = vset.pattern.permute.xlu0 0
  %230 = vperm.xlu0 %229, %v224
  %v231 = vpop.permute.xlu0 %230
  %234 = vset.pattern.permute.xlu0 0
  %235 = vperm.xlu0 %234, %v225
  %v236 = vpop.permute.xlu0 %235
  %239 = vset.pattern.permute.xlu0 0
  %240 = vperm.xlu0 %239, %v226
  %v241 = vpop.permute.xlu0 %240
  %244 = vset.pattern.permute.xlu0 0
  %245 = vperm.xlu0 %244, %v227
  %v246 = vpop.permute.xlu0 %245
  %vm248 = vcmask 261120
  %v250 = vsel %vm248, %v220, 0
  %v253 = vsel %vm248, %v221, 0
  %v256 = vsel %vm248, %v222, 0
  %v259 = vsel %vm248, %v223, 0
  %261 = vmatprep.subr.mxu0 0.0
  %262 = vmatpush1.msra.mxu0 0.0
  %263 = vmatprep.subr.mxu0 0.0
  %264 = vmatpush1.msra.mxu0 0.0
  %265 = vmatprep.subr.mxu0 0.0
  %266 = vmatpush1.msra.mxu0 0.0
  %267 = vmatprep.subr.mxu0 0.0
  %268 = vmatpush1.msra.mxu0 0.0
  %269 = vmatprep.subr.mxu0 0.0
  %270 = vmatpush1.msra.mxu0 0.0
  %271 = vmatprep.subr.mxu0 0.0
  %272 = vmatpush1.msra.mxu0 0.0
  %273 = vmatprep.subr.mxu0 0.0
  %274 = vmatpush1.msra.mxu0 0.0
  %275 = vmatprep.subr.mxu0 0.0
  %276 = vmatpush1.msra.mxu0 0.0
  %277 = vmatprep.subr.mxu0 0.0
  %278 = vmatpush1.msra.mxu0 0.0
  %279 = vmatprep.subr.mxu0 0.0
  %280 = vmatpush1.msra.mxu0 0.0
  %281 = vmatprep.subr.mxu0 0.0
  %282 = vmatpush1.msra.mxu0 0.0
  %283 = vmatprep.subr.mxu0 0.0
  %284 = vmatpush1.msra.mxu0 0.0
  %285 = vmatprep.subr.mxu0 0.0
  %286 = vmatpush1.msra.mxu0 %v219
  %287 = vmatprep.subr.mxu0 0.0
  %288 = vmatpush1.msra.mxu0 %v218
  %289 = vmatprep.subr.mxu0 0.0
  %290 = vmatpush1.msra.mxu0 %v217
  %291 = vmatprep.subr.mxu0 0.0
  %292 = vmatpush1.msra.mxu0 %v216
  %293 = vmatprep.subr.mxu0 0.0
  %294 = vmatpush2.msra.mxu0 0.0
  %295 = vmatprep.subr.mxu0 0.0
  %296 = vmatpush2.msra.mxu0 0.0
  %297 = vmatprep.subr.mxu0 0.0
  %298 = vmatpush2.msra.mxu0 0.0
  %299 = vmatprep.subr.mxu0 0.0
  %300 = vmatpush2.msra.mxu0 0.0
  %301 = vmatprep.subr.mxu0 0.0
  %302 = vmatpush2.msra.mxu0 0.0
  %303 = vmatprep.subr.mxu0 0.0
  %304 = vmatpush2.msra.mxu0 0.0
  %305 = vmatprep.subr.mxu0 0.0
  %306 = vmatpush2.msra.mxu0 0.0
  %307 = vmatprep.subr.mxu0 0.0
  %308 = vmatpush2.msra.mxu0 0.0
  %309 = vmatprep.subr.mxu0 0.0
  %310 = vmatpush2.msra.mxu0 0.0
  %311 = vmatprep.subr.mxu0 0.0
  %312 = vmatpush2.msra.mxu0 0.0
  %313 = vmatprep.subr.mxu0 0.0
  %314 = vmatpush2.msra.mxu0 0.0
  %315 = vmatprep.subr.mxu0 0.0
  %316 = vmatpush2.msra.mxu0 0.0
  %317 = vmatprep.subr.mxu0 0.0
  %318 = vmatpush2.msra.mxu0 0.0
  %319 = vmatprep.subr.mxu0 0.0
  %320 = vmatpush2.msra.mxu0 0.0
  %321 = vmatprep.subr.mxu0 0.0
  %322 = vmatpush2.msra.mxu0 0.0
  %323 = vmatprep.subr.mxu0 0.0
  %324 = vmatpush2.msra.mxu0 0.0
  %325 = vmatprep.mubr.f32.mxu0 0.0
  %326 = vmatmul.mubr.f32.gmra.mxu0 %v250
  %v327 = vpop.f32.mrf.mxu0
  %v328 = vadd.f32 %v231, %v327
  %v329 = vpop.f32.mrf.mxu0
  %330 = vmatprep.mubr.f32.mxu0 0.0
  %331 = vmatmul.mubr.f32.gmra.mxu0 %v253
  %v332 = vpop.f32.mrf.mxu0
  %v333 = vadd.f32 %v236, %v332
  %v334 = vpop.f32.mrf.mxu0
  %335 = vmatprep.mubr.f32.mxu0 0.0
  %336 = vmatmul.mubr.f32.gmra.mxu0 %v256
  %v337 = vpop.f32.mrf.mxu0
  %v338 = vadd.f32 %v241, %v337
  %v339 = vpop.f32.mrf.mxu0
  %340 = vmatprep.mubr.f32.mxu0 0.0
  %341 = vmatmul.mubr.f32.gmra.mxu0 %v259
  %v342 = vpop.f32.mrf.mxu0
  %v343 = vadd.f32 %v246, %v342
  %v344 = vpop.f32.mrf.mxu0
  %345 = vdwg.mxu0
  %v346 = vtanh.pop %v328
  %v347 = vtanh.pop %v333
  %v348 = vtanh.pop %v338
  %v349 = vtanh.pop %v343
  %v350 = vld [vmem:[%s5] sm:$0xff]
  %v351 = vld [vmem:[%s5 + $0x8] sm:$0xff]
  %v352 = vld [vmem:[%s6] sm:$0xff]
  %v353 = vld [vmem:[%s6 + $0x8] sm:$0xff]
  %355 = vset.pattern.permute.xlu0 0
  %356 = vperm.xlu0 %355, %v352
  %v357 = vpop.permute.xlu0 %356
  %360 = vset.pattern.permute.xlu0 0
  %361 = vperm.xlu0 %360, %v353
  %v362 = vpop.permute.xlu0 %361
  %v365 = vsel %vm248, %v350, 0
  %v368 = vsel %vm248, %v351, 0
  %370 = vmatprep.subr.mxu0 0.0
  %371 = vmatpush1.msra.mxu0 0.0
  %372 = vmatprep.subr.mxu0 0.0
  %373 = vmatpush1.msra.mxu0 0.0
  %374 = vmatprep.subr.mxu0 0.0
  %375 = vmatpush1.msra.mxu0 0.0
  %376 = vmatprep.subr.mxu0 0.0
  %377 = vmatpush1.msra.mxu0 0.0
  %378 = vmatprep.subr.mxu0 0.0
  %379 = vmatpush1.msra.mxu0 0.0
  %380 = vmatprep.subr.mxu0 0.0
  %381 = vmatpush1.msra.mxu0 0.0
  %382 = vmatprep.subr.mxu0 0.0
  %383 = vmatpush1.msra.mxu0 0.0
  %384 = vmatprep.subr.mxu0 0.0
  %385 = vmatpush1.msra.mxu0 0.0
  %386 = vmatprep.subr.mxu0 0.0
  %387 = vmatpush1.msra.mxu0 0.0
  %388 = vmatprep.subr.mxu0 0.0
  %389 = vmatpush1.msra.mxu0 0.0
  %390 = vmatprep.subr.mxu0 0.0
  %391 = vmatpush1.msra.mxu0 0.0
  %392 = vmatprep.subr.mxu0 0.0
  %393 = vmatpush1.msra.mxu0 0.0
  %394 = vmatprep.subr.mxu0 0.0
  %395 = vmatpush1.msra.mxu0 %v349
  %396 = vmatprep.subr.mxu0 0.0
  %397 = vmatpush1.msra.mxu0 %v348
  %398 = vmatprep.subr.mxu0 0.0
  %399 = vmatpush1.msra.mxu0 %v347
  %400 = vmatprep.subr.mxu0 0.0
  %401 = vmatpush1.msra.mxu0 %v346
  %402 = vmatprep.subr.mxu0 0.0
  %403 = vmatpush2.msra.mxu0 0.0
  %404 = vmatprep.subr.mxu0 0.0
  %405 = vmatpush2.msra.mxu0 0.0
  %406 = vmatprep.subr.mxu0 0.0
  %407 = vmatpush2.msra.mxu0 0.0
  %408 = vmatprep.subr.mxu0 0.0
  %409 = vmatpush2.msra.mxu0 0.0
  %410 = vmatprep.subr.mxu0 0.0
  %411 = vmatpush2.msra.mxu0 0.0
  %412 = vmatprep.subr.mxu0 0.0
  %413 = vmatpush2.msra.mxu0 0.0
  %414 = vmatprep.subr.mxu0 0.0
  %415 = vmatpush2.msra.mxu0 0.0
  %416 = vmatprep.subr.mxu0 0.0
  %417 = vmatpush2.msra.mxu0 0.0
  %418 = vmatprep.subr.mxu0 0.0
  %419 = vmatpush2.msra.mxu0 0.0
  %420 = vmatprep.subr.mxu0 0.0
  %421 = vmatpush2.msra.mxu0 0.0
  %422 = vmatprep.subr.mxu0 0.0
  %423 = vmatpush2.msra.mxu0 0.0
  %424 = vmatprep.subr.mxu0 0.0
  %425 = vmatpush2.msra.mxu0 0.0
  %426 = vmatprep.subr.mxu0 0.0
  %427 = vmatpush2.msra.mxu0 0.0
  %428 = vmatprep.subr.mxu0 0.0
  %429 = vmatpush2.msra.mxu0 0.0
  %430 = vmatprep.subr.mxu0 0.0
  %431 = vmatpush2.msra.mxu0 0.0
  %432 = vmatprep.subr.mxu0 0.0
  %433 = vmatpush2.msra.mxu0 0.0
  %434 = vmatprep.mubr.f32.mxu0 0.0
  %435 = vmatmul.mubr.f32.gmra.mxu0 %v365
  %v436 = vpop.f32.mrf.mxu0
  %v437 = vadd.f32 %v357, %v436
  %v438 = vpop.f32.mrf.mxu0
  %439 = vmatprep.mubr.f32.mxu0 0.0
  %440 = vmatmul.mubr.f32.gmra.mxu0 %v368
  %v441 = vpop.f32.mrf.mxu0
  %v442 = vadd.f32 %v362, %v441
  %v443 = vpop.f32.mrf.mxu0
  %444 = vdwg.mxu0
  %v445 = vlaneseq
  %v446 = vshrl.u32 %v445, 7
  %v447 = vand.u32 2147483647, %v437
  %v448 = vsub.f32 0.0, %v447
  %v449 = vmul.f32 %v448, 1.442695
  %v450 = vpow.pop %v449
  %v451 = vadd.f32 %v450, 1.0
  %v452 = vrcp.pop %v451
  %vm453 = vcmp.ge.f32.partialorder %v437, 0.0
  %v454 = vmul.f32 %v450, %v452
  %v455 = vsel %vm453, %v452, %v454
  %v456 = vmax.f32 %v437, 0.0
  %v457 = vadd.f32 %v450, 1.0
  %v458 = vlog2.pop %v457
  %v459 = vmul.f32 %v458, 0.6931472
  %v460 = vmul.f32 -0.5, %v450
  %v461 = vadd.f32 %v460, 1.0
  %v462 = vmul.f32 %v461, %v450
  %v463 = vand.u32 2147483647, %v450
  %vm464 = vcmp.lt.f32.partialorder %v463, 0.0004427343
  %v465 = vsel %vm464, %v462, %v459
  %v466 = vadd.f32 %v456, %v465
  %v467 = vmax.f32 %v466, 0.001
  %vm468 = vcmp.lt.s32.totalorder %v446, 4
  %vm469 = vcmp.lt.s32.totalorder %v446, 8
  %v470 = vsel %vm469, %v467, %v437
  %v471 = vsel %vm468, %v455, %v470
  %472 = vst [vmem:[%s7] sm:$0xff] %v471
  %473 = vst [vmem:[%s7 + $0x8] sm:$0xff] %v442
  // Predicated region
  $region30: #{_forward_impl.1} parent=0 // pred_check
    _
  $region31: #{_forward_impl.1} parent=0 // pred_check_branch
    %475 = sbr.rel (0) target = $region33
  $region32: #{_forward_impl.1} parent=0 // pred_region
    _
  $region33: #{_forward_impl.1} parent=0 // pred_fallthru
    _
  // Predicated region
  $region34: #{_forward_impl.1} parent=0 // pred_check
    _
  $region35: #{_forward_impl.1} parent=0 // pred_check_branch
    %477 = sbr.rel (0) target = $region37
  $region36: #{_forward_impl.1} parent=0 // pred_region
    _
  $region37: #{_forward_impl.1} parent=0 // pred_fallthru
    _

</llo_original>
